<compile_context>
chip_gen: v7x
topology: tpu7x:2x2x1
jax: 0.10.0
libtpu: 0.0.40
codegen_flags: <defaults>
</compile_context>

<pallas_src>
import jax
import jax.numpy as jnp
from jax.experimental import pallas as pl
from jax.experimental.pallas import tpu as pltpu

_LANE = 128          # TPU lane width: classifier head padded to lane-dense width
_SUBLANE_BF16 = 16   # bf16 sublane pack: keep batch tiles a multiple of this


def _round_up(x: int, m: int) -> int:
    return -(-x // m) * m


def _pick_batch_tile(batch: int) -> int:
    """Adaptive batch tile (multiple of 16 rows).

    - tiny batches: one 16-row tile (no wasted MXU work / writeback);
    - B > 16: size the tile so the grid has >= 2 steps, so the "parallel"
      batch axis can shard across both TensorCores on v7x;
    - large batches: cap at 256 (512 for B >= 1024, amortizing the ~0.35 us
      per-grid-step overhead on v6e while staying tiny vs. VMEM budgets).
    """
    if batch <= _SUBLANE_BF16:
        return _SUBLANE_BF16
    cap = 512 if batch >= 1024 else 256
    return min(cap, _round_up(pl.cdiv(batch, 2), _SUBLANE_BF16))


def _mlp_backbone_kernel(x_ref, w1_ref, b1_ref, w2_ref, b2_ref, w3_ref, b3_ref, o_ref):
    """Fused 3-layer MLP forward for one batch tile:
    relu(relu(x@W1+b1)@W2+b2)@W3+b3 — bf16 MXU operands, f32 accumulation."""
    x = x_ref[...].astype(jnp.bfloat16)          # cast under the DMA (VPU, free)
    h1 = jnp.dot(x, w1_ref[...], preferred_element_type=jnp.float32) + b1_ref[...]
    h1 = jnp.maximum(h1, 0.0).astype(jnp.bfloat16)
    h2 = jnp.dot(h1, w2_ref[...], preferred_element_type=jnp.float32) + b2_ref[...]
    h2 = jnp.maximum(h2, 0.0).astype(jnp.bfloat16)
    out = jnp.dot(h2, w3_ref[...], preferred_element_type=jnp.float32) + b3_ref[...]
    o_ref[...] = out.astype(o_ref.dtype)         # bf16 store (halves writeback)


def prepare_params(params, num_classes):
    """One-time preprocessing (hoisted out of the per-call forward path):
    bf16 weight cast + lane-padding of the classifier head to a multiple of 128."""
    w1, b1, w2, b2, w3, b3 = params
    c_pad = _round_up(max(num_classes, 1), _LANE)
    w3p = jnp.pad(w3, ((0, 0), (0, c_pad - w3.shape[1])))
    b3p = jnp.pad(b3, ((0, 0), (0, c_pad - b3.shape[1])))
    return (w1.astype(jnp.bfloat16), b1.astype(jnp.float32),
            w2.astype(jnp.bfloat16), b2.astype(jnp.float32),
            w3p.astype(jnp.bfloat16), b3p.astype(jnp.float32))


def continual_model_forward(x_nchw, prepared_params, num_classes):
    """Equivalent of ContinualModel.forward(x) = self.net(x)."""
    w1, b1, w2, b2, w3, b3 = prepared_params
    B = x_nchw.shape[0]
    x2d = x_nchw.reshape(B, -1)        # flatten NCHW -> [B, C*H*W] (torch x.view)
    D = x2d.shape[1]
    H = w1.shape[1]
    c_pad = w3.shape[1]                # already lane-padded at init

    tb = _pick_batch_tile(B)
    n_tiles = pl.cdiv(B, tb)           # partial last block: OOB output rows masked

    resident = lambda shape: pl.BlockSpec(shape, lambda i: (0, 0))  # stays in VMEM

    # Honest cost estimate (real batch; bf16 weights counted at 2 B/elem).
    flops = 2 * B * (D * H + H * H + H * c_pad)
    bytes_accessed = (4 * x2d.size                       # f32 input read
                      + 2 * (w1.size + w2.size + w3.size)  # bf16 weights
                      + 4 * (b1.size + b2.size + b3.size)  # f32 biases
                      + 2 * B * c_pad)                     # bf16 output write

    out = pl.pallas_call(
        _mlp_backbone_kernel,
        out_shape=jax.ShapeDtypeStruct((B, c_pad), jnp.bfloat16),
        grid=(n_tiles,),
        in_specs=[
            pl.BlockSpec((tb, D), lambda i: (i, 0)),     # batch tile of x (f32)
            resident((D, H)), resident((1, H)),          # W1, b1 (resident)
            resident((H, H)), resident((1, H)),          # W2, b2 (resident)
            resident((H, c_pad)), resident((1, c_pad)),  # W3, b3 (lane-padded)
        ],
        out_specs=pl.BlockSpec((tb, c_pad), lambda i: (i, 0)),
        compiler_params=pltpu.CompilerParams(
            dimension_semantics=("parallel",)),          # independent batch rows
        cost_estimate=pl.CostEstimate(
            flops=flops, transcendentals=0, bytes_accessed=bytes_accessed),
    )(x2d, w1, b1, w2, b2, w3, b3)

    # Tiny slice/cast on [B, num_classes] only; parity with the f32 torch output.
    return out[:, :num_classes].astype(jnp.float32)


def init_params(key, in_dim, hidden, num_classes):
    """Deterministic parameter init (Glorot-ish scaling), f32 'master' params."""
    k1, k2, k3 = jax.random.split(key, 3)
    w1 = jax.random.normal(k1, (in_dim, hidden), jnp.float32) * (1.0 / jnp.sqrt(in_dim))
    b1 = jnp.zeros((1, hidden), jnp.float32)
    w2 = jax.random.normal(k2, (hidden, hidden), jnp.float32) * (1.0 / jnp.sqrt(hidden))
    b2 = jnp.zeros((1, hidden), jnp.float32)
    w3 = jax.random.normal(k3, (hidden, num_classes), jnp.float32) * (1.0 / jnp.sqrt(hidden))
    b3 = jnp.zeros((1, num_classes), jnp.float32)
    return (w1, b1, w2, b2, w3, b3)


if __name__ == "__main__":
    key = jax.random.PRNGKey(0)
    kx, kp = jax.random.split(key)

    # Small shapes consistent with an image-classification forward pass.
    B, C, Himg, Wimg = 2, 4, 16, 16
    hidden = 128
    num_classes = 10
    in_dim = C * Himg * Wimg  # 1024

    x = jax.random.normal(kx, (B, C, Himg, Wimg), jnp.float32)
    params = init_params(kp, in_dim, hidden, num_classes)
    prepared = prepare_params(params, num_classes)      # one-time, outside forward

    out = continual_model_forward(x, prepared, num_classes)
    out = jax.block_until_ready(out)

    # Pure-JAX reference of the same backbone, mimicking the kernel's bf16
    # operand casts (f32 accumulation) and bf16 output store, so tolerances
    # stay tight.
    w1, b1, w2, b2, w3, b3 = params
    bf = lambda a: a.astype(jnp.bfloat16)
    x2d = x.reshape(B, -1)
    h1 = jnp.maximum(
        jnp.dot(bf(x2d), bf(w1), preferred_element_type=jnp.float32) + b1, 0.0)
    h2 = jnp.maximum(
        jnp.dot(bf(h1), bf(w2), preferred_element_type=jnp.float32) + b2, 0.0)
    w3p = jnp.pad(w3, ((0, 0), (0, 0)))
    ref = jnp.dot(bf(h2), bf(w3), preferred_element_type=jnp.float32) + b3
    ref = ref.astype(jnp.bfloat16).astype(jnp.float32)

    assert out.shape == (B, num_classes)
    assert jnp.allclose(out, ref, atol=3e-2, rtol=3e-2)

    print("KERNEL_OK")
</pallas_src>

<mosaic_0001>
module attributes {stable_mosaic.version = 11 : i64} {
  func.func @_mlp_backbone_kernel(%arg0: i32, %arg1: memref<16x1024xf32, #tpu.memory_space<vmem>>, %arg2: memref<1024x128xbf16, #tpu.memory_space<vmem>>, %arg3: memref<1x128xf32, #tpu.memory_space<vmem>>, %arg4: memref<128x128xbf16, #tpu.memory_space<vmem>>, %arg5: memref<1x128xf32, #tpu.memory_space<vmem>>, %arg6: memref<128x128xbf16, #tpu.memory_space<vmem>>, %arg7: memref<1x128xf32, #tpu.memory_space<vmem>>, %arg8: memref<16x128xbf16, #tpu.memory_space<vmem>>) attributes {dimension_semantics = [#tpu.dimension_semantics<parallel>], iteration_bounds = array<i64: 1>, scalar_prefetch = 0 : i64, scratch_operands = 0 : i64, tpu.core_type = #tpu.core_type<tc>, window_params = [{transform_indices = @transform_0, window_bounds = array<i64: 16, 1024>}, {pipeline_mode = #tpu.pipeline_mode<synchronous>, transform_indices = @transform_1, window_bounds = array<i64: 1024, 128>}, {pipeline_mode = #tpu.pipeline_mode<synchronous>, transform_indices = @transform_2, window_bounds = array<i64: 1, 128>}, {pipeline_mode = #tpu.pipeline_mode<synchronous>, transform_indices = @transform_3, window_bounds = array<i64: 128, 128>}, {pipeline_mode = #tpu.pipeline_mode<synchronous>, transform_indices = @transform_4, window_bounds = array<i64: 1, 128>}, {pipeline_mode = #tpu.pipeline_mode<synchronous>, transform_indices = @transform_5, window_bounds = array<i64: 128, 128>}, {pipeline_mode = #tpu.pipeline_mode<synchronous>, transform_indices = @transform_6, window_bounds = array<i64: 1, 128>}, {transform_indices = @transform_7, window_bounds = array<i64: 16, 128>}]} {
    %c0 = arith.constant 0 : index
    %c0_0 = arith.constant 0 : index
    %0 = vector.load %arg1[%c0, %c0_0] : memref<16x1024xf32, #tpu.memory_space<vmem>>, vector<16x1024xf32>
    %1 = arith.truncf %0 : vector<16x1024xf32> to vector<16x1024xbf16>
    %c0_1 = arith.constant 0 : index
    %c0_2 = arith.constant 0 : index
    %2 = vector.load %arg2[%c0_1, %c0_2] : memref<1024x128xbf16, #tpu.memory_space<vmem>>, vector<1024x128xbf16>
    %cst = arith.constant dense<0.000000e+00> : vector<16x128xf32>
    %3 = tpu.matmul %1, %2, %cst {dimension_numbers = #tpu.dot_dimension_numbers<[1], [0], [0], [1], [0, 0, 1, 1], [], []>} : vector<16x1024xbf16>, vector<1024x128xbf16>, vector<16x128xf32> -> vector<16x128xf32>
    %c0_3 = arith.constant 0 : index
    %c0_4 = arith.constant 0 : index
    %4 = vector.load %arg3[%c0_3, %c0_4] : memref<1x128xf32, #tpu.memory_space<vmem>>, vector<1x128xf32>
    %5 = vector.broadcast %4 : vector<1x128xf32> to vector<16x128xf32>
    %6 = arith.addf %3, %5 : vector<16x128xf32>
    %cst_5 = arith.constant 0.000000e+00 : f32
    %7 = vector.broadcast %cst_5 : f32 to vector<16x128xf32>
    %8 = arith.maximumf %6, %7 : vector<16x128xf32>
    %9 = arith.truncf %8 : vector<16x128xf32> to vector<16x128xbf16>
    %c0_6 = arith.constant 0 : index
    %c0_7 = arith.constant 0 : index
    %10 = vector.load %arg4[%c0_6, %c0_7] : memref<128x128xbf16, #tpu.memory_space<vmem>>, vector<128x128xbf16>
    %cst_8 = arith.constant dense<0.000000e+00> : vector<16x128xf32>
    %11 = tpu.matmul %9, %10, %cst_8 {dimension_numbers = #tpu.dot_dimension_numbers<[1], [0], [0], [1], [0, 0, 1, 1], [], []>} : vector<16x128xbf16>, vector<128x128xbf16>, vector<16x128xf32> -> vector<16x128xf32>
    %c0_9 = arith.constant 0 : index
    %c0_10 = arith.constant 0 : index
    %12 = vector.load %arg5[%c0_9, %c0_10] : memref<1x128xf32, #tpu.memory_space<vmem>>, vector<1x128xf32>
    %13 = vector.broadcast %12 : vector<1x128xf32> to vector<16x128xf32>
    %14 = arith.addf %11, %13 : vector<16x128xf32>
    %cst_11 = arith.constant 0.000000e+00 : f32
    %15 = vector.broadcast %cst_11 : f32 to vector<16x128xf32>
    %16 = arith.maximumf %14, %15 : vector<16x128xf32>
    %17 = arith.truncf %16 : vector<16x128xf32> to vector<16x128xbf16>
    %c0_12 = arith.constant 0 : index
    %c0_13 = arith.constant 0 : index
    %18 = vector.load %arg6[%c0_12, %c0_13] : memref<128x128xbf16, #tpu.memory_space<vmem>>, vector<128x128xbf16>
    %cst_14 = arith.constant dense<0.000000e+00> : vector<16x128xf32>
    %19 = tpu.matmul %17, %18, %cst_14 {dimension_numbers = #tpu.dot_dimension_numbers<[1], [0], [0], [1], [0, 0, 1, 1], [], []>} : vector<16x128xbf16>, vector<128x128xbf16>, vector<16x128xf32> -> vector<16x128xf32>
    %c0_15 = arith.constant 0 : index
    %c0_16 = arith.constant 0 : index
    %20 = vector.load %arg7[%c0_15, %c0_16] : memref<1x128xf32, #tpu.memory_space<vmem>>, vector<1x128xf32>
    %21 = vector.broadcast %20 : vector<1x128xf32> to vector<16x128xf32>
    %22 = arith.addf %19, %21 : vector<16x128xf32>
    %23 = arith.truncf %22 : vector<16x128xf32> to vector<16x128xbf16>
    %c0_17 = arith.constant 0 : index
    %c0_18 = arith.constant 0 : index
    %24 = vector.load %arg8[%c0_17, %c0_18] : memref<16x128xbf16, #tpu.memory_space<vmem>>, vector<16x128xbf16>
    tpu.vector_store %arg8[%c0_17, %c0_18], %23 {strides = array<i32>} : memref<16x128xbf16, #tpu.memory_space<vmem>>, vector<16x128xbf16>,
    return
  }
  func.func @transform_0(%arg0: i32) -> (i32, i32) {
    %c0_i32 = arith.constant 0 : i32
    %c0_i32_0 = arith.constant 0 : i32
    return %arg0, %c0_i32 : i32, i32
  }
  func.func @transform_1(%arg0: i32) -> (i32, i32) {
    %c0_i32 = arith.constant 0 : i32
    %c0_i32_0 = arith.constant 0 : i32
    %c0_i32_1 = arith.constant 0 : i32
    return %c0_i32, %c0_i32_0 : i32, i32
  }
  func.func @transform_2(%arg0: i32) -> (i32, i32) {
    %c0_i32 = arith.constant 0 : i32
    %c0_i32_0 = arith.constant 0 : i32
    %c0_i32_1 = arith.constant 0 : i32
    return %c0_i32, %c0_i32_0 : i32, i32
  }
  func.func @transform_3(%arg0: i32) -> (i32, i32) {
    %c0_i32 = arith.constant 0 : i32
    %c0_i32_0 = arith.constant 0 : i32
    %c0_i32_1 = arith.constant 0 : i32
    return %c0_i32, %c0_i32_0 : i32, i32
  }
  func.func @transform_4(%arg0: i32) -> (i32, i32) {
    %c0_i32 = arith.constant 0 : i32
    %c0_i32_0 = arith.constant 0 : i32
    %c0_i32_1 = arith.constant 0 : i32
    return %c0_i32, %c0_i32_0 : i32, i32
  }
  func.func @transform_5(%arg0: i32) -> (i32, i32) {
    %c0_i32 = arith.constant 0 : i32
    %c0_i32_0 = arith.constant 0 : i32
    %c0_i32_1 = arith.constant 0 : i32
    return %c0_i32, %c0_i32_0 : i32, i32
  }
  func.func @transform_6(%arg0: i32) -> (i32, i32) {
    %c0_i32 = arith.constant 0 : i32
    %c0_i32_0 = arith.constant 0 : i32
    %c0_i32_1 = arith.constant 0 : i32
    return %c0_i32, %c0_i32_0 : i32, i32
  }
  func.func @transform_7(%arg0: i32) -> (i32, i32) {
    %c0_i32 = arith.constant 0 : i32
    %c0_i32_0 = arith.constant 0 : i32
    return %arg0, %c0_i32 : i32, i32
  }
}

</mosaic_0001>

<llo_original>
// kernel: tpu_custom_call.1
$region0: #{tpu_custom_call.1}
  #allocation0 [shape = 'u32[]', space=smem, size = 0x4, offset = 0x4, fixed_abs, tag = 'smem constant byte address 0x4 - core index']
  #allocation1 [shape = 'u32[144,128]{1,0:T(1,128)}', space=vmem, size = 0x12000, scoped, tag = 'internal scratch']
  %s0 = inlined_call_operand.hbm [shape: f32[2,1024], index: 0, kind: input, shape index: {}]
  %s1 = inlined_call_operand.hbm [shape: bf16[1024,128], index: 1, kind: input, shape index: {}]
  %s2 = inlined_call_operand.vmem [shape: f32[1,128], index: 2, kind: input, shape index: {}]
  %s3 = inlined_call_operand.hbm [shape: bf16[128,128], index: 3, kind: input, shape index: {}]
  %s4 = inlined_call_operand.vmem [shape: f32[1,128], index: 4, kind: input, shape index: {}]
  %s5 = inlined_call_operand.hbm [shape: bf16[128,128], index: 5, kind: input, shape index: {}]
  %s6 = inlined_call_operand.vmem [shape: f32[1,128], index: 6, kind: input, shape index: {}]
  %s7 = inlined_call_operand.hbm [shape: bf16[2,128], index: 7, kind: output, shape index: {}]
  %s8 = sld [smem:[#allocation0]]
  $region54: #{tpu_custom_call.1} parent=0
    _
  %s10 = ssub.s32 1, %s8
  %s11 = scalar_select 0, %s10, %s8
  $region1: #{tpu_custom_call.1} parent=0
    #allocation2 [shape = 'u8[65536]{0}', space=vmem, size = 0x10000, scoped, tag = 'input window, operand 0, single buffered']
    #allocation3 [shape = 's32[1]{0}', space=sflag, size = 0x4, scoped, tag = 'scoped memory for tpu_custom_call.1']
    #allocation4 [shape = 's32[1]{0}', space=sflag, size = 0x4, scoped, tag = 'scoped memory for tpu_custom_call.1']
    #allocation5 [shape = 'u8[262144]{0}', space=vmem, size = 0x40000, scoped, tag = 'input window, operand 1, single buffered']
    #allocation6 [shape = 's32[1]{0}', space=sflag, size = 0x4, scoped, tag = 'scoped memory for tpu_custom_call.1']
    #allocation7 [shape = 'u8[32768]{0}', space=vmem, size = 0x8000, scoped, tag = 'input window, operand 3, single buffered']
    #allocation8 [shape = 'u8[32768]{0}', space=vmem, size = 0x8000, scoped, tag = 'input window, operand 5, single buffered']
    #allocation9 [shape = 's32[1]{0}', space=sflag, size = 0x4, scoped, tag = 'scoped memory for tpu_custom_call.1']
    #allocation10 [shape = 'u8[4096]{0}', space=vmem, size = 0x1000, scoped, tag = 'output window, operand 0, single buffered']
    %12 = vsyncpa [#allocation3], 0
    %13 = vsyncpa [#allocation6], 0
    %14 = vsyncpa [#allocation9], 0
    %15 = vsyncpa [#allocation4], 0
    // Predicated region
    $region2: #{tpu_custom_call.1} parent=1 // pred_check
      _
    $region3: #{tpu_custom_call.1} parent=1 // pred_check_branch
      %17 = sbr.rel (0) target = $region5
    $region4: #{tpu_custom_call.1} parent=1 // pred_region
      %s19 = ssub.s32 2048, 256
      %20 = vsyncadd [#allocation3], %s19
      %s21 = sshll.u32 [#allocation2], 4
      %s22 = int_to_ptr.vmem [resolvable:$true] %s21
      %27 = dma.hbm_to_vmem [thread:$0]  %s0, 256, %s22, [#allocation3], 256, 256, 16
    $region5: #{tpu_custom_call.1} parent=1 // pred_fallthru
      _
    // Predicated region
    $region6: #{tpu_custom_call.1} parent=1 // pred_check
      _
    $region7: #{tpu_custom_call.1} parent=1 // pred_check_branch
      %29 = sbr.rel (0) target = $region9
    $region8: #{tpu_custom_call.1} parent=1 // pred_region
      %s31 = ssub.s32 8192, 8192
      %32 = vsyncadd [#allocation6], %s31
      %s33 = sshll.u32 [#allocation5], 4
      %s34 = int_to_ptr.vmem [resolvable:$true] %s33
      %39 = dma.hbm_to_vmem [thread:$0]  %s1, 8192, %s34, [#allocation6], 64, 64, 4
    $region9: #{tpu_custom_call.1} parent=1 // pred_fallthru
      _
    // Predicated region
    $region10: #{tpu_custom_call.1} parent=1 // pred_check
      _
    $region11: #{tpu_custom_call.1} parent=1 // pred_check_branch
      %41 = sbr.rel (0) target = $region13
    $region12: #{tpu_custom_call.1} parent=1 // pred_region
      _
    $region13: #{tpu_custom_call.1} parent=1 // pred_fallthru
      _
    // Predicated region
    $region14: #{tpu_custom_call.1} parent=1 // pred_check
      _
    $region15: #{tpu_custom_call.1} parent=1 // pred_check_branch
      %43 = sbr.rel (0) target = $region17
    $region16: #{tpu_custom_call.1} parent=1 // pred_region
      %s45 = ssub.s32 1024, 1024
      %46 = vsyncadd [#allocation6], %s45
      %s47 = sshll.u32 [#allocation7], 4
      %s48 = int_to_ptr.vmem [resolvable:$true] %s47
      %53 = dma.hbm_to_vmem [thread:$0]  %s3, 1024, %s48, [#allocation6], 64, 64, 4
    $region17: #{tpu_custom_call.1} parent=1 // pred_fallthru
      _
    // Predicated region
    $region18: #{tpu_custom_call.1} parent=1 // pred_check
      _
    $region19: #{tpu_custom_call.1} parent=1 // pred_check_branch
      %55 = sbr.rel (0) target = $region21
    $region20: #{tpu_custom_call.1} parent=1 // pred_region
      _
    $region21: #{tpu_custom_call.1} parent=1 // pred_fallthru
      _
    // Predicated region
    $region22: #{tpu_custom_call.1} parent=1 // pred_check
      _
    $region23: #{tpu_custom_call.1} parent=1 // pred_check_branch
      %57 = sbr.rel (0) target = $region25
    $region24: #{tpu_custom_call.1} parent=1 // pred_region
      %s59 = ssub.s32 1024, 1024
      %60 = vsyncadd [#allocation9], %s59
      %s61 = sshll.u32 [#allocation8], 4
      %s62 = int_to_ptr.vmem [resolvable:$true] %s61
      %67 = dma.hbm_to_vmem [thread:$0]  %s5, 1024, %s62, [#allocation9], 64, 64, 4
    $region25: #{tpu_custom_call.1} parent=1 // pred_fallthru
      _
    // Predicated region
    $region26: #{tpu_custom_call.1} parent=1 // pred_check
      _
    $region27: #{tpu_custom_call.1} parent=1 // pred_check_branch
      %69 = sbr.rel (0) target = $region29
    $region28: #{tpu_custom_call.1} parent=1 // pred_region
      _
    $region29: #{tpu_custom_call.1} parent=1 // pred_fallthru
      _
    // Predicated region
    $region30: #{tpu_custom_call.1} parent=1 // pred_check
      _
    $region31: #{tpu_custom_call.1} parent=1 // pred_check_branch
      %71 = sbr.rel (0) target = $region33
    $region32: #{tpu_custom_call.1} parent=1 // pred_region
      %72 = dma.done [#allocation3], 2048
    $region33: #{tpu_custom_call.1} parent=1 // pred_fallthru
      _
    // Predicated region
    $region34: #{tpu_custom_call.1} parent=1 // pred_check
      _
    $region35: #{tpu_custom_call.1} parent=1 // pred_check_branch
      %74 = sbr.rel (0) target = $region37
    $region36: #{tpu_custom_call.1} parent=1 // pred_region
      %75 = dma.done [#allocation6], 8192
    $region37: #{tpu_custom_call.1} parent=1 // pred_fallthru
      _
    // Predicated region
    $region38: #{tpu_custom_call.1} parent=1 // pred_check
      _
    $region39: #{tpu_custom_call.1} parent=1 // pred_check_branch
      %77 = sbr.rel (0) target = $region41
    $region40: #{tpu_custom_call.1} parent=1 // pred_region
      %78 = dma.done [#allocation6], 1024
    $region41: #{tpu_custom_call.1} parent=1 // pred_fallthru
      _
    // Predicated region
    $region42: #{tpu_custom_call.1} parent=1 // pred_check
      _
    $region43: #{tpu_custom_call.1} parent=1 // pred_check_branch
      %80 = sbr.rel (0) target = $region45
    $region44: #{tpu_custom_call.1} parent=1 // pred_region
      %81 = dma.done [#allocation9], 1024
    $region45: #{tpu_custom_call.1} parent=1 // pred_fallthru
      _
    %v83 = vld [vmem:[#allocation2] sm:$0xff]
    %v84 = vld [vmem:[#allocation2 + $0x8] sm:$0xff]
    %v85 = vld [vmem:[#allocation2 + $0x10] sm:$0xff]
    %v86 = vld [vmem:[#allocation2 + $0x18] sm:$0xff]
    %v87 = vld [vmem:[#allocation2 + $0x20] sm:$0xff]
    %v88 = vld [vmem:[#allocation2 + $0x28] sm:$0xff]
    %v89 = vld [vmem:[#allocation2 + $0x30] sm:$0xff]
    %v90 = vld [vmem:[#allocation2 + $0x38] sm:$0xff]
    %v91 = vld [vmem:[#allocation2 + $0x40] sm:$0xff]
    %v92 = vld [vmem:[#allocation2 + $0x48] sm:$0xff]
    %v93 = vld [vmem:[#allocation2 + $0x50] sm:$0xff]
    %v94 = vld [vmem:[#allocation2 + $0x58] sm:$0xff]
    %v95 = vld [vmem:[#allocation2 + $0x60] sm:$0xff]
    %v96 = vld [vmem:[#allocation2 + $0x68] sm:$0xff]
    %v97 = vld [vmem:[#allocation2 + $0x70] sm:$0xff]
    %v98 = vld [vmem:[#allocation2 + $0x78] sm:$0xff]
    %v115 = vcombine.low %v83, %v85
    %v116 = vcombine.high %v83, %v85
    %v117 = vcombine.low %v87, %v89
    %v118 = vcombine.high %v87, %v89
    %v120 = vunpack.c.l.s4 1983009808
    %v121 = vunpack.c.0.s8 %v120
    %v122 = vlaneseq
    %v123 = vshrl.u32 %v122, 7
    %v124 = vsub.s32 %v121, %v123
    %v125 = vrot.slane %v115, %v124
    %v127 = vunpack.c.l.s4 1983009808
    %v128 = vunpack.c.0.s8 %v127
    %v129 = vlaneseq
    %v130 = vshrl.u32 %v129, 7
    %v131 = vsub.s32 %v128, %v130
    %v132 = vrot.slane %v116, %v131
    %v134 = vunpack.c.l.s4 1983009808
    %v135 = vunpack.c.0.s8 %v134
    %v136 = vlaneseq
    %v137 = vshrl.u32 %v136, 7
    %v138 = vsub.s32 %v135, %v137
    %v139 = vrot.slane %v117, %v138
    %v141 = vunpack.c.l.s4 1983009808
    %v142 = vunpack.c.0.s8 %v141
    %v143 = vlaneseq
    %v144 = vshrl.u32 %v143, 7
    %v145 = vsub.s32 %v142, %v144
    %v146 = vrot.slane %v118, %v145
    %v147 = vcombine.low %v125, %v139
    %v148 = vcombine.high %v125, %v139
    %v149 = vcombine.low %v132, %v146
    %v150 = vcombine.high %v132, %v146
    %v151 = vcombine.low %v84, %v86
    %v152 = vcombine.high %v84, %v86
    %v153 = vcombine.low %v88, %v90
    %v154 = vcombine.high %v88, %v90
    %v156 = vunpack.c.l.s4 1983009808
    %v157 = vunpack.c.0.s8 %v156
    %v158 = vlaneseq
    %v159 = vshrl.u32 %v158, 7
    %v160 = vsub.s32 %v157, %v159
    %v161 = vrot.slane %v151, %v160
    %v163 = vunpack.c.l.s4 1983009808
    %v164 = vunpack.c.0.s8 %v163
    %v165 = vlaneseq
    %v166 = vshrl.u32 %v165, 7
    %v167 = vsub.s32 %v164, %v166
    %v168 = vrot.slane %v152, %v167
    %v170 = vunpack.c.l.s4 1983009808
    %v171 = vunpack.c.0.s8 %v170
    %v172 = vlaneseq
    %v173 = vshrl.u32 %v172, 7
    %v174 = vsub.s32 %v171, %v173
    %v175 = vrot.slane %v153, %v174
    %v177 = vunpack.c.l.s4 1983009808
    %v178 = vunpack.c.0.s8 %v177
    %v179 = vlaneseq
    %v180 = vshrl.u32 %v179, 7
    %v181 = vsub.s32 %v178, %v180
    %v182 = vrot.slane %v154, %v181
    %v183 = vcombine.low %v161, %v175
    %v184 = vcombine.high %v161, %v175
    %v185 = vcombine.low %v168, %v182
    %v186 = vcombine.high %v168, %v182
    %v187 = vcombine.low %v91, %v93
    %v188 = vcombine.high %v91, %v93
    %v189 = vcombine.low %v95, %v97
    %v190 = vcombine.high %v95, %v97
    %v192 = vunpack.c.l.s4 1983009808
    %v193 = vunpack.c.0.s8 %v192
    %v194 = vlaneseq
    %v195 = vshrl.u32 %v194, 7
    %v196 = vsub.s32 %v193, %v195
    %v197 = vrot.slane %v187, %v196
    %v199 = vunpack.c.l.s4 1983009808
    %v200 = vunpack.c.0.s8 %v199
    %v201 = vlaneseq
    %v202 = vshrl.u32 %v201, 7
    %v203 = vsub.s32 %v200, %v202
    %v204 = vrot.slane %v188, %v203
    %v206 = vunpack.c.l.s4 1983009808
    %v207 = vunpack.c.0.s8 %v206
    %v208 = vlaneseq
    %v209 = vshrl.u32 %v208, 7
    %v210 = vsub.s32 %v207, %v209
    %v211 = vrot.slane %v189, %v210
    %v213 = vunpack.c.l.s4 1983009808
    %v214 = vunpack.c.0.s8 %v213
    %v215 = vlaneseq
    %v216 = vshrl.u32 %v215, 7
    %v217 = vsub.s32 %v214, %v216
    %v218 = vrot.slane %v190, %v217
    %v219 = vcombine.low %v197, %v211
    %v220 = vcombine.high %v197, %v211
    %v221 = vcombine.low %v204, %v218
    %v222 = vcombine.high %v204, %v218
    %v223 = vcombine.low %v92, %v94
    %v224 = vcombine.high %v92, %v94
    %v225 = vcombine.low %v96, %v98
    %v226 = vcombine.high %v96, %v98
    %v228 = vunpack.c.l.s4 1983009808
    %v229 = vunpack.c.0.s8 %v228
    %v230 = vlaneseq
    %v231 = vshrl.u32 %v230, 7
    %v232 = vsub.s32 %v229, %v231
    %v233 = vrot.slane %v223, %v232
    %v235 = vunpack.c.l.s4 1983009808
    %v236 = vunpack.c.0.s8 %v235
    %v237 = vlaneseq
    %v238 = vshrl.u32 %v237, 7
    %v239 = vsub.s32 %v236, %v238
    %v240 = vrot.slane %v224, %v239
    %v242 = vunpack.c.l.s4 1983009808
    %v243 = vunpack.c.0.s8 %v242
    %v244 = vlaneseq
    %v245 = vshrl.u32 %v244, 7
    %v246 = vsub.s32 %v243, %v245
    %v247 = vrot.slane %v225, %v246
    %v249 = vunpack.c.l.s4 1983009808
    %v250 = vunpack.c.0.s8 %v249
    %v251 = vlaneseq
    %v252 = vshrl.u32 %v251, 7
    %v253 = vsub.s32 %v250, %v252
    %v254 = vrot.slane %v226, %v253
    %v255 = vcombine.low %v233, %v247
    %v256 = vcombine.high %v233, %v247
    %v257 = vcombine.low %v240, %v254
    %v258 = vcombine.high %v240, %v254
    %v275 = vpack.c.bf16 %v219, %v147
    %v276 = vpack.c.bf16 %v220, %v148
    %v277 = vpack.c.bf16 %v221, %v149
    %v278 = vpack.c.bf16 %v222, %v150
    %v279 = vpack.c.bf16 %v255, %v183
    %v280 = vpack.c.bf16 %v256, %v184
    %v281 = vpack.c.bf16 %v257, %v185
    %v282 = vpack.c.bf16 %v258, %v186
    %v283 = vld [vmem:[#allocation5] sm:$0xf]
    %v284 = vld [vmem:[#allocation5 + $0x4] sm:$0xf]
    %v285 = vld [vmem:[#allocation5 + $0x8] sm:$0xf]
    %v286 = vld [vmem:[#allocation5 + $0xc] sm:$0xf]
    %v287 = vld [vmem:[#allocation5 + $0x10] sm:$0xf]
    %v288 = vld [vmem:[#allocation5 + $0x14] sm:$0xf]
    %v289 = vld [vmem:[#allocation5 + $0x18] sm:$0xf]
    %v290 = vld [vmem:[#allocation5 + $0x1c] sm:$0xf]
    %v291 = vld [vmem:[#allocation5 + $0x20] sm:$0xf]
    %v292 = vld [vmem:[#allocation5 + $0x24] sm:$0xf]
    %v293 = vld [vmem:[#allocation5 + $0x28] sm:$0xf]
    %v294 = vld [vmem:[#allocation5 + $0x2c] sm:$0xf]
    %v295 = vld [vmem:[#allocation5 + $0x30] sm:$0xf]
    %v296 = vld [vmem:[#allocation5 + $0x34] sm:$0xf]
    %v297 = vld [vmem:[#allocation5 + $0x38] sm:$0xf]
    %v298 = vld [vmem:[#allocation5 + $0x3c] sm:$0xf]
    %v299 = vld [vmem:[#allocation5 + $0x40] sm:$0xf]
    %v300 = vld [vmem:[#allocation5 + $0x44] sm:$0xf]
    %v301 = vld [vmem:[#allocation5 + $0x48] sm:$0xf]
    %v302 = vld [vmem:[#allocation5 + $0x4c] sm:$0xf]
    %v303 = vld [vmem:[#allocation5 + $0x50] sm:$0xf]
    %v304 = vld [vmem:[#allocation5 + $0x54] sm:$0xf]
    %v305 = vld [vmem:[#allocation5 + $0x58] sm:$0xf]
    %v306 = vld [vmem:[#allocation5 + $0x5c] sm:$0xf]
    %v307 = vld [vmem:[#allocation5 + $0x60] sm:$0xf]
    %v308 = vld [vmem:[#allocation5 + $0x64] sm:$0xf]
    %v309 = vld [vmem:[#allocation5 + $0x68] sm:$0xf]
    %v310 = vld [vmem:[#allocation5 + $0x6c] sm:$0xf]
    %v311 = vld [vmem:[#allocation5 + $0x70] sm:$0xf]
    %v312 = vld [vmem:[#allocation5 + $0x74] sm:$0xf]
    %v313 = vld [vmem:[#allocation5 + $0x78] sm:$0xf]
    %v314 = vld [vmem:[#allocation5 + $0x7c] sm:$0xf]
    %v315 = vld [vmem:[#allocation5 + $0x80] sm:$0xf]
    %v316 = vld [vmem:[#allocation5 + $0x84] sm:$0xf]
    %v317 = vld [vmem:[#allocation5 + $0x88] sm:$0xf]
    %v318 = vld [vmem:[#allocation5 + $0x8c] sm:$0xf]
    %v319 = vld [vmem:[#allocation5 + $0x90] sm:$0xf]
    %v320 = vld [vmem:[#allocation5 + $0x94] sm:$0xf]
    %v321 = vld [vmem:[#allocation5 + $0x98] sm:$0xf]
    %v322 = vld [vmem:[#allocation5 + $0x9c] sm:$0xf]
    %v323 = vld [vmem:[#allocation5 + $0xa0] sm:$0xf]
    %v324 = vld [vmem:[#allocation5 + $0xa4] sm:$0xf]
    %v325 = vld [vmem:[#allocation5 + $0xa8] sm:$0xf]
    %v326 = vld [vmem:[#allocation5 + $0xac] sm:$0xf]
    %v327 = vld [vmem:[#allocation5 + $0xb0] sm:$0xf]
    %v328 = vld [vmem:[#allocation5 + $0xb4] sm:$0xf]
    %v329 = vld [vmem:[#allocation5 + $0xb8] sm:$0xf]
    %v330 = vld [vmem:[#allocation5 + $0xbc] sm:$0xf]
    %v331 = vld [vmem:[#allocation5 + $0xc0] sm:$0xf]
    %v332 = vld [vmem:[#allocation5 + $0xc4] sm:$0xf]
    %v333 = vld [vmem:[#allocation5 + $0xc8] sm:$0xf]
    %v334 = vld [vmem:[#allocation5 + $0xcc] sm:$0xf]
    %v335 = vld [vmem:[#allocation5 + $0xd0] sm:$0xf]
    %v336 = vld [vmem:[#allocation5 + $0xd4] sm:$0xf]
    %v337 = vld [vmem:[#allocation5 + $0xd8] sm:$0xf]
    %v338 = vld [vmem:[#allocation5 + $0xdc] sm:$0xf]
    %v339 = vld [vmem:[#allocation5 + $0xe0] sm:$0xf]
    %v340 = vld [vmem:[#allocation5 + $0xe4] sm:$0xf]
    %v341 = vld [vmem:[#allocation5 + $0xe8] sm:$0xf]
    %v342 = vld [vmem:[#allocation5 + $0xec] sm:$0xf]
    %v343 = vld [vmem:[#allocation5 + $0xf0] sm:$0xf]
    %v344 = vld [vmem:[#allocation5 + $0xf4] sm:$0xf]
    %v345 = vld [vmem:[#allocation5 + $0xf8] sm:$0xf]
    %v346 = vld [vmem:[#allocation5 + $0xfc] sm:$0xf]
    %v347 = vld [vmem:[#allocation5 + $0x100] sm:$0xf]
    %v348 = vld [vmem:[#allocation5 + $0x104] sm:$0xf]
    %v349 = vld [vmem:[#allocation5 + $0x108] sm:$0xf]
    %v350 = vld [vmem:[#allocation5 + $0x10c] sm:$0xf]
    %v351 = vld [vmem:[#allocation5 + $0x110] sm:$0xf]
    %v352 = vld [vmem:[#allocation5 + $0x114] sm:$0xf]
    %v353 = vld [vmem:[#allocation5 + $0x118] sm:$0xf]
    %v354 = vld [vmem:[#allocation5 + $0x11c] sm:$0xf]
    %v355 = vld [vmem:[#allocation5 + $0x120] sm:$0xf]
    %v356 = vld [vmem:[#allocation5 + $0x124] sm:$0xf]
    %v357 = vld [vmem:[#allocation5 + $0x128] sm:$0xf]
    %v358 = vld [vmem:[#allocation5 + $0x12c] sm:$0xf]
    %v359 = vld [vmem:[#allocation5 + $0x130] sm:$0xf]
    %v360 = vld [vmem:[#allocation5 + $0x134] sm:$0xf]
    %v361 = vld [vmem:[#allocation5 + $0x138] sm:$0xf]
    %v362 = vld [vmem:[#allocation5 + $0x13c] sm:$0xf]
    %v363 = vld [vmem:[#allocation5 + $0x140] sm:$0xf]
    %v364 = vld [vmem:[#allocation5 + $0x144] sm:$0xf]
    %v365 = vld [vmem:[#allocation5 + $0x148] sm:$0xf]
    %v366 = vld [vmem:[#allocation5 + $0x14c] sm:$0xf]
    %v367 = vld [vmem:[#allocation5 + $0x150] sm:$0xf]
    %v368 = vld [vmem:[#allocation5 + $0x154] sm:$0xf]
    %v369 = vld [vmem:[#allocation5 + $0x158] sm:$0xf]
    %v370 = vld [vmem:[#allocation5 + $0x15c] sm:$0xf]
    %v371 = vld [vmem:[#allocation5 + $0x160] sm:$0xf]
    %v372 = vld [vmem:[#allocation5 + $0x164] sm:$0xf]
    %v373 = vld [vmem:[#allocation5 + $0x168] sm:$0xf]
    %v374 = vld [vmem:[#allocation5 + $0x16c] sm:$0xf]
    %v375 = vld [vmem:[#allocation5 + $0x170] sm:$0xf]
    %v376 = vld [vmem:[#allocation5 + $0x174] sm:$0xf]
    %v377 = vld [vmem:[#allocation5 + $0x178] sm:$0xf]
    %v378 = vld [vmem:[#allocation5 + $0x17c] sm:$0xf]
    %v379 = vld [vmem:[#allocation5 + $0x180] sm:$0xf]
    %v380 = vld [vmem:[#allocation5 + $0x184] sm:$0xf]
    %v381 = vld [vmem:[#allocation5 + $0x188] sm:$0xf]
    %v382 = vld [vmem:[#allocation5 + $0x18c] sm:$0xf]
    %v383 = vld [vmem:[#allocation5 + $0x190] sm:$0xf]
    %v384 = vld [vmem:[#allocation5 + $0x194] sm:$0xf]
    %v385 = vld [vmem:[#allocation5 + $0x198] sm:$0xf]
    %v386 = vld [vmem:[#allocation5 + $0x19c] sm:$0xf]
    %v387 = vld [vmem:[#allocation5 + $0x1a0] sm:$0xf]
    %v388 = vld [vmem:[#allocation5 + $0x1a4] sm:$0xf]
    %v389 = vld [vmem:[#allocation5 + $0x1a8] sm:$0xf]
    %v390 = vld [vmem:[#allocation5 + $0x1ac] sm:$0xf]
    %v391 = vld [vmem:[#allocation5 + $0x1b0] sm:$0xf]
    %v392 = vld [vmem:[#allocation5 + $0x1b4] sm:$0xf]
    %v393 = vld [vmem:[#allocation5 + $0x1b8] sm:$0xf]
    %v394 = vld [vmem:[#allocation5 + $0x1bc] sm:$0xf]
    %v395 = vld [vmem:[#allocation5 + $0x1c0] sm:$0xf]
    %v396 = vld [vmem:[#allocation5 + $0x1c4] sm:$0xf]
    %v397 = vld [vmem:[#allocation5 + $0x1c8] sm:$0xf]
    %v398 = vld [vmem:[#allocation5 + $0x1cc] sm:$0xf]
    %v399 = vld [vmem:[#allocation5 + $0x1d0] sm:$0xf]
    %v400 = vld [vmem:[#allocation5 + $0x1d4] sm:$0xf]
    %v401 = vld [vmem:[#allocation5 + $0x1d8] sm:$0xf]
    %v402 = vld [vmem:[#allocation5 + $0x1dc] sm:$0xf]
    %v403 = vld [vmem:[#allocation5 + $0x1e0] sm:$0xf]
    %v404 = vld [vmem:[#allocation5 + $0x1e4] sm:$0xf]
    %v405 = vld [vmem:[#allocation5 + $0x1e8] sm:$0xf]
    %v406 = vld [vmem:[#allocation5 + $0x1ec] sm:$0xf]
    %v407 = vld [vmem:[#allocation5 + $0x1f0] sm:$0xf]
    %v408 = vld [vmem:[#allocation5 + $0x1f4] sm:$0xf]
    %v409 = vld [vmem:[#allocation5 + $0x1f8] sm:$0xf]
    %v410 = vld [vmem:[#allocation5 + $0x1fc] sm:$0xf]
    %v411 = vld [vmem:[%s2] sm:$0x1]
    %v413 = vlaneseq
    %v414 = vshrl.u32 %v413, 7
    %v415 = vsub.s32 0, %v414
    %v416 = vrot.slane %v411, %v415
    %v546 = vunpack.c.l.b16 %v283
    %v547 = vunpack.c.l.b16 %v284
    %v548 = vunpack.c.l.b16 %v285
    %v549 = vunpack.c.l.b16 %v286
    %v550 = vunpack.c.l.b16 %v287
    %v551 = vunpack.c.l.b16 %v288
    %v552 = vunpack.c.l.b16 %v289
    %v553 = vunpack.c.l.b16 %v290
    %v554 = vunpack.c.l.b16 %v291
    %v555 = vunpack.c.l.b16 %v292
    %v556 = vunpack.c.l.b16 %v293
    %v557 = vunpack.c.l.b16 %v294
    %v558 = vunpack.c.l.b16 %v295
    %v559 = vunpack.c.l.b16 %v296
    %v560 = vunpack.c.l.b16 %v297
    %v561 = vunpack.c.l.b16 %v298
    %v562 = vunpack.c.l.b16 %v299
    %v563 = vunpack.c.l.b16 %v300
    %v564 = vunpack.c.l.b16 %v301
    %v565 = vunpack.c.l.b16 %v302
    %v566 = vunpack.c.l.b16 %v303
    %v567 = vunpack.c.l.b16 %v304
    %v568 = vunpack.c.l.b16 %v305
    %v569 = vunpack.c.l.b16 %v306
    %v570 = vunpack.c.l.b16 %v307
    %v571 = vunpack.c.l.b16 %v308
    %v572 = vunpack.c.l.b16 %v309
    %v573 = vunpack.c.l.b16 %v310
    %v574 = vunpack.c.l.b16 %v311
    %v575 = vunpack.c.l.b16 %v312
    %v576 = vunpack.c.l.b16 %v313
    %v577 = vunpack.c.l.b16 %v314
    %v578 = vunpack.c.l.b16 %v315
    %v579 = vunpack.c.l.b16 %v316
    %v580 = vunpack.c.l.b16 %v317
    %v581 = vunpack.c.l.b16 %v318
    %v582 = vunpack.c.l.b16 %v319
    %v583 = vunpack.c.l.b16 %v320
    %v584 = vunpack.c.l.b16 %v321
    %v585 = vunpack.c.l.b16 %v322
    %v586 = vunpack.c.l.b16 %v323
    %v587 = vunpack.c.l.b16 %v324
    %v588 = vunpack.c.l.b16 %v325
    %v589 = vunpack.c.l.b16 %v326
    %v590 = vunpack.c.l.b16 %v327
    %v591 = vunpack.c.l.b16 %v328
    %v592 = vunpack.c.l.b16 %v329
    %v593 = vunpack.c.l.b16 %v330
    %v594 = vunpack.c.l.b16 %v331
    %v595 = vunpack.c.l.b16 %v332
    %v596 = vunpack.c.l.b16 %v333
    %v597 = vunpack.c.l.b16 %v334
    %v598 = vunpack.c.l.b16 %v335
    %v599 = vunpack.c.l.b16 %v336
    %v600 = vunpack.c.l.b16 %v337
    %v601 = vunpack.c.l.b16 %v338
    %v602 = vunpack.c.l.b16 %v339
    %v603 = vunpack.c.l.b16 %v340
    %v604 = vunpack.c.l.b16 %v341
    %v605 = vunpack.c.l.b16 %v342
    %v606 = vunpack.c.l.b16 %v343
    %v607 = vunpack.c.l.b16 %v344
    %v608 = vunpack.c.l.b16 %v345
    %v609 = vunpack.c.l.b16 %v346
    %v610 = vunpack.c.l.b16 %v347
    %v611 = vunpack.c.l.b16 %v348
    %v612 = vunpack.c.l.b16 %v349
    %v613 = vunpack.c.l.b16 %v350
    %v614 = vunpack.c.l.b16 %v351
    %v615 = vunpack.c.l.b16 %v352
    %v616 = vunpack.c.l.b16 %v353
    %v617 = vunpack.c.l.b16 %v354
    %v618 = vunpack.c.l.b16 %v355
    %v619 = vunpack.c.l.b16 %v356
    %v620 = vunpack.c.l.b16 %v357
    %v621 = vunpack.c.l.b16 %v358
    %v622 = vunpack.c.l.b16 %v359
    %v623 = vunpack.c.l.b16 %v360
    %v624 = vunpack.c.l.b16 %v361
    %v625 = vunpack.c.l.b16 %v362
    %v626 = vunpack.c.l.b16 %v363
    %v627 = vunpack.c.l.b16 %v364
    %v628 = vunpack.c.l.b16 %v365
    %v629 = vunpack.c.l.b16 %v366
    %v630 = vunpack.c.l.b16 %v367
    %v631 = vunpack.c.l.b16 %v368
    %v632 = vunpack.c.l.b16 %v369
    %v633 = vunpack.c.l.b16 %v370
    %v634 = vunpack.c.l.b16 %v371
    %v635 = vunpack.c.l.b16 %v372
    %v636 = vunpack.c.l.b16 %v373
    %v637 = vunpack.c.l.b16 %v374
    %v638 = vunpack.c.l.b16 %v375
    %v639 = vunpack.c.l.b16 %v376
    %v640 = vunpack.c.l.b16 %v377
    %v641 = vunpack.c.l.b16 %v378
    %v642 = vunpack.c.l.b16 %v379
    %v643 = vunpack.c.l.b16 %v380
    %v644 = vunpack.c.l.b16 %v381
    %v645 = vunpack.c.l.b16 %v382
    %v646 = vunpack.c.l.b16 %v383
    %v647 = vunpack.c.l.b16 %v384
    %v648 = vunpack.c.l.b16 %v385
    %v649 = vunpack.c.l.b16 %v386
    %v650 = vunpack.c.l.b16 %v387
    %v651 = vunpack.c.l.b16 %v388
    %v652 = vunpack.c.l.b16 %v389
    %v653 = vunpack.c.l.b16 %v390
    %v654 = vunpack.c.l.b16 %v391
    %v655 = vunpack.c.l.b16 %v392
    %v656 = vunpack.c.l.b16 %v393
    %v657 = vunpack.c.l.b16 %v394
    %v658 = vunpack.c.l.b16 %v395
    %v659 = vunpack.c.l.b16 %v396
    %v660 = vunpack.c.l.b16 %v397
    %v661 = vunpack.c.l.b16 %v398
    %v662 = vunpack.c.l.b16 %v399
    %v663 = vunpack.c.l.b16 %v400
    %v664 = vunpack.c.l.b16 %v401
    %v665 = vunpack.c.l.b16 %v402
    %v666 = vunpack.c.l.b16 %v403
    %v667 = vunpack.c.l.b16 %v404
    %v668 = vunpack.c.l.b16 %v405
    %v669 = vunpack.c.l.b16 %v406
    %v670 = vunpack.c.l.b16 %v407
    %v671 = vunpack.c.l.b16 %v408
    %v672 = vunpack.c.l.b16 %v409
    %v673 = vunpack.c.l.b16 %v410
    %v674 = vpack.c.b16 %v547, %v546
    %v675 = vpack.c.b16 %v549, %v548
    %v676 = vpack.c.b16 %v551, %v550
    %v677 = vpack.c.b16 %v553, %v552
    %v678 = vpack.c.b16 %v555, %v554
    %v679 = vpack.c.b16 %v557, %v556
    %v680 = vpack.c.b16 %v559, %v558
    %v681 = vpack.c.b16 %v561, %v560
    %v682 = vpack.c.b16 %v563, %v562
    %v683 = vpack.c.b16 %v565, %v564
    %v684 = vpack.c.b16 %v567, %v566
    %v685 = vpack.c.b16 %v569, %v568
    %v686 = vpack.c.b16 %v571, %v570
    %v687 = vpack.c.b16 %v573, %v572
    %v688 = vpack.c.b16 %v575, %v574
    %v689 = vpack.c.b16 %v577, %v576
    %v690 = vpack.c.b16 %v579, %v578
    %v691 = vpack.c.b16 %v581, %v580
    %v692 = vpack.c.b16 %v583, %v582
    %v693 = vpack.c.b16 %v585, %v584
    %v694 = vpack.c.b16 %v587, %v586
    %v695 = vpack.c.b16 %v589, %v588
    %v696 = vpack.c.b16 %v591, %v590
    %v697 = vpack.c.b16 %v593, %v592
    %v698 = vpack.c.b16 %v595, %v594
    %v699 = vpack.c.b16 %v597, %v596
    %v700 = vpack.c.b16 %v599, %v598
    %v701 = vpack.c.b16 %v601, %v600
    %v702 = vpack.c.b16 %v603, %v602
    %v703 = vpack.c.b16 %v605, %v604
    %v704 = vpack.c.b16 %v607, %v606
    %v705 = vpack.c.b16 %v609, %v608
    %v706 = vpack.c.b16 %v611, %v610
    %v707 = vpack.c.b16 %v613, %v612
    %v708 = vpack.c.b16 %v615, %v614
    %v709 = vpack.c.b16 %v617, %v616
    %v710 = vpack.c.b16 %v619, %v618
    %v711 = vpack.c.b16 %v621, %v620
    %v712 = vpack.c.b16 %v623, %v622
    %v713 = vpack.c.b16 %v625, %v624
    %v714 = vpack.c.b16 %v627, %v626
    %v715 = vpack.c.b16 %v629, %v628
    %v716 = vpack.c.b16 %v631, %v630
    %v717 = vpack.c.b16 %v633, %v632
    %v718 = vpack.c.b16 %v635, %v634
    %v719 = vpack.c.b16 %v637, %v636
    %v720 = vpack.c.b16 %v639, %v638
    %v721 = vpack.c.b16 %v641, %v640
    %v722 = vpack.c.b16 %v643, %v642
    %v723 = vpack.c.b16 %v645, %v644
    %v724 = vpack.c.b16 %v647, %v646
    %v725 = vpack.c.b16 %v649, %v648
    %v726 = vpack.c.b16 %v651, %v650
    %v727 = vpack.c.b16 %v653, %v652
    %v728 = vpack.c.b16 %v655, %v654
    %v729 = vpack.c.b16 %v657, %v656
    %v730 = vpack.c.b16 %v659, %v658
    %v731 = vpack.c.b16 %v661, %v660
    %v732 = vpack.c.b16 %v663, %v662
    %v733 = vpack.c.b16 %v665, %v664
    %v734 = vpack.c.b16 %v667, %v666
    %v735 = vpack.c.b16 %v669, %v668
    %v736 = vpack.c.b16 %v671, %v670
    %v737 = vpack.c.b16 %v673, %v672
    %802 = vmatprep.subr.bf16.mxu0 0
    %803 = vmatpush1.bf16.msra.mxu0 %v674
    %804 = vmatprep.subr.bf16.mxu0 0
    %805 = vmatpush1.bf16.msra.mxu0 %v675
    %806 = vmatprep.subr.bf16.mxu0 0
    %807 = vmatpush1.bf16.msra.mxu0 %v676
    %808 = vmatprep.subr.bf16.mxu0 0
    %809 = vmatpush1.bf16.msra.mxu0 %v677
    %810 = vmatprep.subr.bf16.mxu0 0
    %811 = vmatpush1.bf16.msra.mxu0 %v678
    %812 = vmatprep.subr.bf16.mxu0 0
    %813 = vmatpush1.bf16.msra.mxu0 %v679
    %814 = vmatprep.subr.bf16.mxu0 0
    %815 = vmatpush1.bf16.msra.mxu0 %v680
    %816 = vmatprep.subr.bf16.mxu0 0
    %817 = vmatpush1.bf16.msra.mxu0 %v681
    %818 = vmatprep.subr.bf16.mxu0 0
    %819 = vmatpush1.bf16.msra.mxu0 %v682
    %820 = vmatprep.subr.bf16.mxu0 0
    %821 = vmatpush1.bf16.msra.mxu0 %v683
    %822 = vmatprep.subr.bf16.mxu0 0
    %823 = vmatpush1.bf16.msra.mxu0 %v684
    %824 = vmatprep.subr.bf16.mxu0 0
    %825 = vmatpush1.bf16.msra.mxu0 %v685
    %826 = vmatprep.subr.bf16.mxu0 0
    %827 = vmatpush1.bf16.msra.mxu0 %v686
    %828 = vmatprep.subr.bf16.mxu0 0
    %829 = vmatpush1.bf16.msra.mxu0 %v687
    %830 = vmatprep.subr.bf16.mxu0 0
    %831 = vmatpush1.bf16.msra.mxu0 %v688
    %832 = vmatprep.subr.bf16.mxu0 0
    %833 = vmatpush1.bf16.msra.mxu0 %v689
    %834 = vmatprep.mubr.bf16.mxu0 %v276
    %835 = vmatmul.mubr.bf16.gmra.mrb[0].mxu0 %v275
    %v836 = vpop.f32.mrb[0].mxu0
    %v837 = vadd.f32 %v416, %v836
    %v838 = vpop.f32.mrb[0].mxu0
    %v839 = vpop.f32.mrb[0].mxu0
    %v840 = vadd.f32 %v416, %v839
    %v841 = vpop.f32.mrb[0].mxu0
    %842 = vdwg.mxu0
    %843 = vmatprep.subr.bf16.mxu0 0
    %844 = vmatpush1.bf16.msra.mxu0 %v690
    %845 = vmatprep.subr.bf16.mxu0 0
    %846 = vmatpush1.bf16.msra.mxu0 %v691
    %847 = vmatprep.subr.bf16.mxu0 0
    %848 = vmatpush1.bf16.msra.mxu0 %v692
    %849 = vmatprep.subr.bf16.mxu0 0
    %850 = vmatpush1.bf16.msra.mxu0 %v693
    %851 = vmatprep.subr.bf16.mxu0 0
    %852 = vmatpush1.bf16.msra.mxu0 %v694
    %853 = vmatprep.subr.bf16.mxu0 0
    %854 = vmatpush1.bf16.msra.mxu0 %v695
    %855 = vmatprep.subr.bf16.mxu0 0
    %856 = vmatpush1.bf16.msra.mxu0 %v696
    %857 = vmatprep.subr.bf16.mxu0 0
    %858 = vmatpush1.bf16.msra.mxu0 %v697
    %859 = vmatprep.subr.bf16.mxu0 0
    %860 = vmatpush1.bf16.msra.mxu0 %v698
    %861 = vmatprep.subr.bf16.mxu0 0
    %862 = vmatpush1.bf16.msra.mxu0 %v699
    %863 = vmatprep.subr.bf16.mxu0 0
    %864 = vmatpush1.bf16.msra.mxu0 %v700
    %865 = vmatprep.subr.bf16.mxu0 0
    %866 = vmatpush1.bf16.msra.mxu0 %v701
    %867 = vmatprep.subr.bf16.mxu0 0
    %868 = vmatpush1.bf16.msra.mxu0 %v702
    %869 = vmatprep.subr.bf16.mxu0 0
    %870 = vmatpush1.bf16.msra.mxu0 %v703
    %871 = vmatprep.subr.bf16.mxu0 0
    %872 = vmatpush1.bf16.msra.mxu0 %v704
    %873 = vmatprep.subr.bf16.mxu0 0
    %874 = vmatpush1.bf16.msra.mxu0 %v705
    %875 = vmatprep.mubr.bf16.mxu0 %v278
    %876 = vmatmul.mubr.bf16.gmra.mrb[0].mxu0 %v277
    %v877 = vpop.f32.mrb[0].mxu0
    %v878 = vadd.f32 %v837, %v877
    %v879 = vpop.f32.mrb[0].mxu0
    %v880 = vpop.f32.mrb[0].mxu0
    %v881 = vadd.f32 %v840, %v880
    %v882 = vpop.f32.mrb[0].mxu0
    %883 = vdwg.mxu0
    %884 = vmatprep.subr.bf16.mxu0 0
    %885 = vmatpush1.bf16.msra.mxu0 %v706
    %886 = vmatprep.subr.bf16.mxu0 0
    %887 = vmatpush1.bf16.msra.mxu0 %v707
    %888 = vmatprep.subr.bf16.mxu0 0
    %889 = vmatpush1.bf16.msra.mxu0 %v708
    %890 = vmatprep.subr.bf16.mxu0 0
    %891 = vmatpush1.bf16.msra.mxu0 %v709
    %892 = vmatprep.subr.bf16.mxu0 0
    %893 = vmatpush1.bf16.msra.mxu0 %v710
    %894 = vmatprep.subr.bf16.mxu0 0
    %895 = vmatpush1.bf16.msra.mxu0 %v711
    %896 = vmatprep.subr.bf16.mxu0 0
    %897 = vmatpush1.bf16.msra.mxu0 %v712
    %898 = vmatprep.subr.bf16.mxu0 0
    %899 = vmatpush1.bf16.msra.mxu0 %v713
    %900 = vmatprep.subr.bf16.mxu0 0
    %901 = vmatpush1.bf16.msra.mxu0 %v714
    %902 = vmatprep.subr.bf16.mxu0 0
    %903 = vmatpush1.bf16.msra.mxu0 %v715
    %904 = vmatprep.subr.bf16.mxu0 0
    %905 = vmatpush1.bf16.msra.mxu0 %v716
    %906 = vmatprep.subr.bf16.mxu0 0
    %907 = vmatpush1.bf16.msra.mxu0 %v717
    %908 = vmatprep.subr.bf16.mxu0 0
    %909 = vmatpush1.bf16.msra.mxu0 %v718
    %910 = vmatprep.subr.bf16.mxu0 0
    %911 = vmatpush1.bf16.msra.mxu0 %v719
    %912 = vmatprep.subr.bf16.mxu0 0
    %913 = vmatpush1.bf16.msra.mxu0 %v720
    %914 = vmatprep.subr.bf16.mxu0 0
    %915 = vmatpush1.bf16.msra.mxu0 %v721
    %916 = vmatprep.mubr.bf16.mxu0 %v280
    %917 = vmatmul.mubr.bf16.gmra.mrb[0].mxu0 %v279
    %v918 = vpop.f32.mrb[0].mxu0
    %v919 = vadd.f32 %v878, %v918
    %v920 = vpop.f32.mrb[0].mxu0
    %v921 = vpop.f32.mrb[0].mxu0
    %v922 = vadd.f32 %v881, %v921
    %v923 = vpop.f32.mrb[0].mxu0
    %924 = vdwg.mxu0
    %925 = vmatprep.subr.bf16.mxu0 0
    %926 = vmatpush1.bf16.msra.mxu0 %v722
    %927 = vmatprep.subr.bf16.mxu0 0
    %928 = vmatpush1.bf16.msra.mxu0 %v723
    %929 = vmatprep.subr.bf16.mxu0 0
    %930 = vmatpush1.bf16.msra.mxu0 %v724
    %931 = vmatprep.subr.bf16.mxu0 0
    %932 = vmatpush1.bf16.msra.mxu0 %v725
    %933 = vmatprep.subr.bf16.mxu0 0
    %934 = vmatpush1.bf16.msra.mxu0 %v726
    %935 = vmatprep.subr.bf16.mxu0 0
    %936 = vmatpush1.bf16.msra.mxu0 %v727
    %937 = vmatprep.subr.bf16.mxu0 0
    %938 = vmatpush1.bf16.msra.mxu0 %v728
    %939 = vmatprep.subr.bf16.mxu0 0
    %940 = vmatpush1.bf16.msra.mxu0 %v729
    %941 = vmatprep.subr.bf16.mxu0 0
    %942 = vmatpush1.bf16.msra.mxu0 %v730
    %943 = vmatprep.subr.bf16.mxu0 0
    %944 = vmatpush1.bf16.msra.mxu0 %v731
    %945 = vmatprep.subr.bf16.mxu0 0
    %946 = vmatpush1.bf16.msra.mxu0 %v732
    %947 = vmatprep.subr.bf16.mxu0 0
    %948 = vmatpush1.bf16.msra.mxu0 %v733
    %949 = vmatprep.subr.bf16.mxu0 0
    %950 = vmatpush1.bf16.msra.mxu0 %v734
    %951 = vmatprep.subr.bf16.mxu0 0
    %952 = vmatpush1.bf16.msra.mxu0 %v735
    %953 = vmatprep.subr.bf16.mxu0 0
    %954 = vmatpush1.bf16.msra.mxu0 %v736
    %955 = vmatprep.subr.bf16.mxu0 0
    %956 = vmatpush1.bf16.msra.mxu0 %v737
    %957 = vmatprep.mubr.bf16.mxu0 %v282
    %958 = vmatmul.mubr.bf16.gmra.mrb[0].mxu0 %v281
    %v959 = vpop.f32.mrb[0].mxu0
    %v960 = vadd.f32 %v919, %v959
    %v961 = vpop.f32.mrb[0].mxu0
    %v962 = vpop.f32.mrb[0].mxu0
    %v963 = vadd.f32 %v922, %v962
    %v964 = vpop.f32.mrb[0].mxu0
    %965 = vdwg.mxu0
    %v966 = vmax.f32 %v960, 0.0
    %v967 = vmax.f32 %v963, 0.0
    %v968 = vpack.c.bf16 %v967, %v966
    %v969 = vld [vmem:[#allocation7] sm:$0xf]
    %v970 = vld [vmem:[#allocation7 + $0x4] sm:$0xf]
    %v971 = vld [vmem:[#allocation7 + $0x8] sm:$0xf]
    %v972 = vld [vmem:[#allocation7 + $0xc] sm:$0xf]
    %v973 = vld [vmem:[#allocation7 + $0x10] sm:$0xf]
    %v974 = vld [vmem:[#allocation7 + $0x14] sm:$0xf]
    %v975 = vld [vmem:[#allocation7 + $0x18] sm:$0xf]
    %v976 = vld [vmem:[#allocation7 + $0x1c] sm:$0xf]
    %v977 = vld [vmem:[#allocation7 + $0x20] sm:$0xf]
    %v978 = vld [vmem:[#allocation7 + $0x24] sm:$0xf]
    %v979 = vld [vmem:[#allocation7 + $0x28] sm:$0xf]
    %v980 = vld [vmem:[#allocation7 + $0x2c] sm:$0xf]
    %v981 = vld [vmem:[#allocation7 + $0x30] sm:$0xf]
    %v982 = vld [vmem:[#allocation7 + $0x34] sm:$0xf]
    %v983 = vld [vmem:[#allocation7 + $0x38] sm:$0xf]
    %v984 = vld [vmem:[#allocation7 + $0x3c] sm:$0xf]
    %v985 = vld [vmem:[%s4] sm:$0x1]
    %v987 = vlaneseq
    %v988 = vshrl.u32 %v987, 7
    %v989 = vsub.s32 0, %v988
    %v990 = vrot.slane %v985, %v989
    %v1008 = vunpack.c.l.b16 %v969
    %v1009 = vunpack.c.l.b16 %v970
    %v1010 = vunpack.c.l.b16 %v971
    %v1011 = vunpack.c.l.b16 %v972
    %v1012 = vunpack.c.l.b16 %v973
    %v1013 = vunpack.c.l.b16 %v974
    %v1014 = vunpack.c.l.b16 %v975
    %v1015 = vunpack.c.l.b16 %v976
    %v1016 = vunpack.c.l.b16 %v977
    %v1017 = vunpack.c.l.b16 %v978
    %v1018 = vunpack.c.l.b16 %v979
    %v1019 = vunpack.c.l.b16 %v980
    %v1020 = vunpack.c.l.b16 %v981
    %v1021 = vunpack.c.l.b16 %v982
    %v1022 = vunpack.c.l.b16 %v983
    %v1023 = vunpack.c.l.b16 %v984
    %v1024 = vpack.c.b16 %v1009, %v1008
    %v1025 = vpack.c.b16 %v1011, %v1010
    %v1026 = vpack.c.b16 %v1013, %v1012
    %v1027 = vpack.c.b16 %v1015, %v1014
    %v1028 = vpack.c.b16 %v1017, %v1016
    %v1029 = vpack.c.b16 %v1019, %v1018
    %v1030 = vpack.c.b16 %v1021, %v1020
    %v1031 = vpack.c.b16 %v1023, %v1022
    %1040 = vmatprep.subr.bf16.mxu0 0
    %1041 = vmatpush1.bf16.msra.mxu0 %v1024
    %1042 = vmatprep.subr.bf16.mxu0 0
    %1043 = vmatpush1.bf16.msra.mxu0 %v1025
    %1044 = vmatprep.subr.bf16.mxu0 0
    %1045 = vmatpush1.bf16.msra.mxu0 %v1026
    %1046 = vmatprep.subr.bf16.mxu0 0
    %1047 = vmatpush1.bf16.msra.mxu0 %v1027
    %1048 = vmatprep.subr.bf16.mxu0 0
    %1049 = vmatpush1.bf16.msra.mxu0 %v1028
    %1050 = vmatprep.subr.bf16.mxu0 0
    %1051 = vmatpush1.bf16.msra.mxu0 %v1029
    %1052 = vmatprep.subr.bf16.mxu0 0
    %1053 = vmatpush1.bf16.msra.mxu0 %v1030
    %1054 = vmatprep.subr.bf16.mxu0 0
    %1055 = vmatpush1.bf16.msra.mxu0 %v1031
    %1056 = vmatprep.subr.bf16.mxu0 0
    %1057 = vmatpush1.bf16.msra.mxu0 0
    %1058 = vmatprep.subr.bf16.mxu0 0
    %1059 = vmatpush1.bf16.msra.mxu0 0
    %1060 = vmatprep.subr.bf16.mxu0 0
    %1061 = vmatpush1.bf16.msra.mxu0 0
    %1062 = vmatprep.subr.bf16.mxu0 0
    %1063 = vmatpush1.bf16.msra.mxu0 0
    %1064 = vmatprep.subr.bf16.mxu0 0
    %1065 = vmatpush1.bf16.msra.mxu0 0
    %1066 = vmatprep.subr.bf16.mxu0 0
    %1067 = vmatpush1.bf16.msra.mxu0 0
    %1068 = vmatprep.subr.bf16.mxu0 0
    %1069 = vmatpush1.bf16.msra.mxu0 0
    %1070 = vmatprep.subr.bf16.mxu0 0
    %1071 = vmatpush1.bf16.msra.mxu0 0
    %1072 = vmatprep.mubr.bf16.mxu0 0
    %1073 = vmatmul.mubr.bf16.gmra.mrb[0].mxu0 %v968
    %v1074 = vpop.f32.mrb[0].mxu0
    %v1075 = vadd.f32 %v990, %v1074
    %v1076 = vpop.f32.mrb[0].mxu0
    %v1077 = vpop.f32.mrb[0].mxu0
    %v1078 = vadd.f32 %v990, %v1077
    %v1079 = vpop.f32.mrb[0].mxu0
    %1080 = vdwg.mxu0
    %v1081 = vmax.f32 %v1075, 0.0
    %v1082 = vmax.f32 %v1078, 0.0
    %v1083 = vpack.c.bf16 %v1082, %v1081
    %v1084 = vld [vmem:[#allocation8] sm:$0xf]
    %v1085 = vld [vmem:[#allocation8 + $0x4] sm:$0xf]
    %v1086 = vld [vmem:[#allocation8 + $0x8] sm:$0xf]
    %v1087 = vld [vmem:[#allocation8 + $0xc] sm:$0xf]
    %v1088 = vld [vmem:[#allocation8 + $0x10] sm:$0xf]
    %v1089 = vld [vmem:[#allocation8 + $0x14] sm:$0xf]
    %v1090 = vld [vmem:[#allocation8 + $0x18] sm:$0xf]
    %v1091 = vld [vmem:[#allocation8 + $0x1c] sm:$0xf]
    %v1092 = vld [vmem:[#allocation8 + $0x20] sm:$0xf]
    %v1093 = vld [vmem:[#allocation8 + $0x24] sm:$0xf]
    %v1094 = vld [vmem:[#allocation8 + $0x28] sm:$0xf]
    %v1095 = vld [vmem:[#allocation8 + $0x2c] sm:$0xf]
    %v1096 = vld [vmem:[#allocation8 + $0x30] sm:$0xf]
    %v1097 = vld [vmem:[#allocation8 + $0x34] sm:$0xf]
    %v1098 = vld [vmem:[#allocation8 + $0x38] sm:$0xf]
    %v1099 = vld [vmem:[#allocation8 + $0x3c] sm:$0xf]
    %v1100 = vld [vmem:[%s6] sm:$0x1]
    %v1102 = vlaneseq
    %v1103 = vshrl.u32 %v1102, 7
    %v1104 = vsub.s32 0, %v1103
    %v1105 = vrot.slane %v1100, %v1104
    %v1123 = vunpack.c.l.b16 %v1084
    %v1124 = vunpack.c.l.b16 %v1085
    %v1125 = vunpack.c.l.b16 %v1086
    %v1126 = vunpack.c.l.b16 %v1087
    %v1127 = vunpack.c.l.b16 %v1088
    %v1128 = vunpack.c.l.b16 %v1089
    %v1129 = vunpack.c.l.b16 %v1090
    %v1130 = vunpack.c.l.b16 %v1091
    %v1131 = vunpack.c.l.b16 %v1092
    %v1132 = vunpack.c.l.b16 %v1093
    %v1133 = vunpack.c.l.b16 %v1094
    %v1134 = vunpack.c.l.b16 %v1095
    %v1135 = vunpack.c.l.b16 %v1096
    %v1136 = vunpack.c.l.b16 %v1097
    %v1137 = vunpack.c.l.b16 %v1098
    %v1138 = vunpack.c.l.b16 %v1099
    %v1139 = vpack.c.b16 %v1124, %v1123
    %v1140 = vpack.c.b16 %v1126, %v1125
    %v1141 = vpack.c.b16 %v1128, %v1127
    %v1142 = vpack.c.b16 %v1130, %v1129
    %v1143 = vpack.c.b16 %v1132, %v1131
    %v1144 = vpack.c.b16 %v1134, %v1133
    %v1145 = vpack.c.b16 %v1136, %v1135
    %v1146 = vpack.c.b16 %v1138, %v1137
    %1155 = vmatprep.subr.bf16.mxu0 0
    %1156 = vmatpush1.bf16.msra.mxu0 %v1139
    %1157 = vmatprep.subr.bf16.mxu0 0
    %1158 = vmatpush1.bf16.msra.mxu0 %v1140
    %1159 = vmatprep.subr.bf16.mxu0 0
    %1160 = vmatpush1.bf16.msra.mxu0 %v1141
    %1161 = vmatprep.subr.bf16.mxu0 0
    %1162 = vmatpush1.bf16.msra.mxu0 %v1142
    %1163 = vmatprep.subr.bf16.mxu0 0
    %1164 = vmatpush1.bf16.msra.mxu0 %v1143
    %1165 = vmatprep.subr.bf16.mxu0 0
    %1166 = vmatpush1.bf16.msra.mxu0 %v1144
    %1167 = vmatprep.subr.bf16.mxu0 0
    %1168 = vmatpush1.bf16.msra.mxu0 %v1145
    %1169 = vmatprep.subr.bf16.mxu0 0
    %1170 = vmatpush1.bf16.msra.mxu0 %v1146
    %1171 = vmatprep.subr.bf16.mxu0 0
    %1172 = vmatpush1.bf16.msra.mxu0 0
    %1173 = vmatprep.subr.bf16.mxu0 0
    %1174 = vmatpush1.bf16.msra.mxu0 0
    %1175 = vmatprep.subr.bf16.mxu0 0
    %1176 = vmatpush1.bf16.msra.mxu0 0
    %1177 = vmatprep.subr.bf16.mxu0 0
    %1178 = vmatpush1.bf16.msra.mxu0 0
    %1179 = vmatprep.subr.bf16.mxu0 0
    %1180 = vmatpush1.bf16.msra.mxu0 0
    %1181 = vmatprep.subr.bf16.mxu0 0
    %1182 = vmatpush1.bf16.msra.mxu0 0
    %1183 = vmatprep.subr.bf16.mxu0 0
    %1184 = vmatpush1.bf16.msra.mxu0 0
    %1185 = vmatprep.subr.bf16.mxu0 0
    %1186 = vmatpush1.bf16.msra.mxu0 0
    %1187 = vmatprep.mubr.bf16.mxu0 0
    %1188 = vmatmul.mubr.bf16.gmra.mrb[0].mxu0 %v1083
    %v1189 = vpop.f32.mrb[0].mxu0
    %v1190 = vadd.f32 %v1105, %v1189
    %v1191 = vpop.f32.mrb[0].mxu0
    %v1192 = vpop.f32.mrb[0].mxu0
    %v1193 = vadd.f32 %v1105, %v1192
    %v1194 = vpop.f32.mrb[0].mxu0
    %1195 = vdwg.mxu0
    %v1196 = vpack.c.bf16 %v1193, %v1190
    %v1198 = vcombine.high %v1196, %v1196
    %v1200 = vunpack.c.l.s4 1966171168
    %v1201 = vunpack.c.0.s8 %v1200
    %v1202 = vlaneseq
    %v1203 = vshrl.u32 %v1202, 7
    %v1204 = vsub.s32 %v1201, %v1203
    %v1205 = vrot.slane %v1196, %v1204
    %v1207 = vunpack.c.l.s4 1966171168
    %v1208 = vunpack.c.0.s8 %v1207
    %v1209 = vlaneseq
    %v1210 = vshrl.u32 %v1209, 7
    %v1211 = vsub.s32 %v1208, %v1210
    %v1212 = vrot.slane %v1198, %v1211
    %v1213 = vcombine.high %v1205, %v1205
    %v1214 = vcombine.high %v1212, %v1212
    %v1216 = vunpack.c.l.s4 1966171168
    %v1217 = vunpack.c.0.s8 %v1216
    %v1218 = vlaneseq
    %v1219 = vshrl.u32 %v1218, 7
    %v1220 = vsub.s32 %v1217, %v1219
    %v1221 = vrot.slane %v1205, %v1220
    %v1223 = vunpack.c.l.s4 1966171168
    %v1224 = vunpack.c.0.s8 %v1223
    %v1225 = vlaneseq
    %v1226 = vshrl.u32 %v1225, 7
    %v1227 = vsub.s32 %v1224, %v1226
    %v1228 = vrot.slane %v1212, %v1227
    %v1230 = vunpack.c.l.s4 1966171168
    %v1231 = vunpack.c.0.s8 %v1230
    %v1232 = vlaneseq
    %v1233 = vshrl.u32 %v1232, 7
    %v1234 = vsub.s32 %v1231, %v1233
    %v1235 = vrot.slane %v1213, %v1234
    %v1237 = vunpack.c.l.s4 1966171168
    %v1238 = vunpack.c.0.s8 %v1237
    %v1239 = vlaneseq
    %v1240 = vshrl.u32 %v1239, 7
    %v1241 = vsub.s32 %v1238, %v1240
    %v1242 = vrot.slane %v1214, %v1241
    %v1243 = vcombine.high %v1221, %v1221
    %v1244 = vcombine.high %v1228, %v1228
    %v1245 = vcombine.high %v1235, %v1235
    %v1246 = vcombine.high %v1242, %v1242
    %1255 = vst [vmem:[#allocation10] sm:$0x1] %v1221
    %1256 = vst [vmem:[#allocation10 + $0x1] sm:$0x1] %v1235
    %1257 = vst [vmem:[#allocation10 + $0x2] sm:$0x1] %v1243
    %1258 = vst [vmem:[#allocation10 + $0x3] sm:$0x1] %v1245
    %1259 = vst [vmem:[#allocation10 + $0x4] sm:$0x1] %v1228
    %1260 = vst [vmem:[#allocation10 + $0x5] sm:$0x1] %v1242
    %1261 = vst [vmem:[#allocation10 + $0x6] sm:$0x1] %v1244
    %1262 = vst [vmem:[#allocation10 + $0x7] sm:$0x1] %v1246
    // Predicated region
    $region46: #{tpu_custom_call.1} parent=1 // pred_check
      _
    $region47: #{tpu_custom_call.1} parent=1 // pred_check_branch
      %1264 = sbr.rel (0) target = $region49
    $region48: #{tpu_custom_call.1} parent=1 // pred_region
      %s1266 = ssub.s32 128, 16
      %1267 = vsyncadd [#allocation4], %s1266
      %s1268 = sshll.u32 [#allocation10], 4
      %s1269 = int_to_ptr.vmem [resolvable:$true] %s1268
      %1274 = dma.vmem_to_hbm [thread:$0]  %s1269, 16, %s7, [#allocation4], 16, 16, 1
    $region49: #{tpu_custom_call.1} parent=1 // pred_fallthru
      _
    // Predicated region
    $region50: #{tpu_custom_call.1} parent=1 // pred_check
      _
    $region51: #{tpu_custom_call.1} parent=1 // pred_check_branch
      %1276 = sbr.rel (0) target = $region53
    $region52: #{tpu_custom_call.1} parent=1 // pred_region
      %1277 = dma.done [#allocation4], 128
    $region53: #{tpu_custom_call.1} parent=1 // pred_fallthru
      _
    %1278 = vsyncpa [#allocation3], 1
    %1279 = vsyncpa [#allocation6], 1
    %1280 = vsyncpa [#allocation9], 1
    %1281 = vsyncpa [#allocation4], 1

</llo_original>
